<compile_context>
chip_gen: v7x
topology: tpu7x:2x2x1
jax: 0.10.0
libtpu: 0.0.40
codegen_flags: <defaults>
</compile_context>

<pallas_src>
import functools

import jax
import jax.numpy as jnp
from jax import lax
from jax.experimental import pallas as pl
from jax.experimental.pallas import tpu as pltpu


_LANES = 128
_MAX_STATIC_GROUPS = 8            # fully unroll the fold statically up to this many groups
_FORI_UNROLL = 4                  # unroll factor of the fori_loop fold on large tiles
_X_BUFFER_BYTES = 8 * 1024 * 1024  # per x pipeline buffer (double-buffered by BlockSpec)


def _choose_hw_tile(C, HW, itemsize):
    """Lane-tile for the H*W reduction axis.

    Target ~8 MiB per x buffer (two pipeline buffers -> ~16 MiB), comfortably
    under the 32 MiB scoped-VMEM limit requested below on v5e/v6e/v7x.
    Prefer a 128-multiple that divides HW so the kernel is statically mask-free.
    """
    max_lanes = max(_LANES,
                    (_X_BUFFER_BYTES // max(1, C * itemsize)) // _LANES * _LANES)
    if HW <= max_lanes:
        return HW                      # single step; full extent is always a legal block
    # Largest 128-multiple divisor of HW that fits the budget (no tail anywhere).
    t = max_lanes
    while t >= _LANES:
        if HW % t == 0:
            break
        t -= _LANES
    else:
        t = 0
    if t >= (3 * max_lanes) // 4:      # accept if within 25% of the cap
        return t
    return max_lanes                   # tail handled statically on the final step only


def _fold_static(x_ref, ngroups, s, m):
    # Small static trip count: fully unrolled, constant lane-aligned slices.
    for gi in range(ngroups):
        blk = x_ref[0, :, gi * _LANES:(gi + 1) * _LANES].astype(jnp.float32)
        s = s + blk
        m = jnp.maximum(m, blk)
    return s, m


def _fold_dynamic(x_ref, ngroups, s, m):
    # Large tiles: fori_loop bounds vreg live ranges and keeps the loop visible.
    def body(gi, carry):
        s, m = carry
        off = pl.multiple_of(gi * _LANES, _LANES)
        blk = x_ref[0, :, pl.ds(off, _LANES)].astype(jnp.float32)
        return s + blk, jnp.maximum(m, blk)

    return lax.fori_loop(0, ngroups, body, (s, m), unroll=_FORI_UNROLL)


def _fold_groups(x_ref, sum_acc, max_acc, ngroups):
    """Fold `ngroups` 128-lane groups of the current tile into the running
    (C, 128) accumulators.  Partials are carried in registers across the loop
    and written back to VMEM scratch exactly once per grid step."""
    if ngroups <= 0:
        return
    s = sum_acc[...]
    m = max_acc[...]
    if ngroups <= _MAX_STATIC_GROUPS:
        s, m = _fold_static(x_ref, ngroups, s, m)
    else:
        s, m = _fold_dynamic(x_ref, ngroups, s, m)
    sum_acc[...] = s
    max_acc[...] = m


def _fold_tail(x_ref, sum_acc, max_acc, start, width):
    """Fold a (<128)-lane static tail slice (executes at most once per batch)."""
    if width <= 0:
        return
    blk = x_ref[0, :, start:start + width].astype(jnp.float32)
    sum_acc[:, :1] = sum_acc[:, :1] + jnp.sum(blk, axis=1, keepdims=True)
    max_acc[:, :1] = jnp.maximum(max_acc[:, :1],
                                 jnp.max(blk, axis=1, keepdims=True))


def _mca_kernel(coef_ref, x_ref, pre_ref, w1t_ref, w2t_ref, o_ref,
                sum_acc, max_acc, *, hw, tile, num_k):
    # coef_ref: (3,)         SMEM  [coefficient1, coefficient2, coefficient3]
    # x_ref:    (1, C, TILE) VMEM  native dtype
    # pre_ref:  (1, 1, C)    VMEM  precomputed relu(BN(conv1x1(scam)))
    # w1t_ref:  (C, C//r)    VMEM  transposed sharedMLP conv1 weight
    # w2t_ref:  (C//r, C)    VMEM  transposed sharedMLP conv2 weight
    # o_ref:    (1, 1, C)    VMEM
    # sum_acc/max_acc: (C, 128) f32 VMEM scratch (persist over the HW grid axis)
    k = pl.program_id(1)

    g_full = tile // _LANES
    rem = tile % _LANES                       # nonzero only for a single full-extent tile
    last_valid = hw - (num_k - 1) * tile      # valid lanes in the final tile (static)
    needs_tail_step = last_valid != tile      # static

    @pl.when(k == 0)
    def _init():
        sum_acc[...] = jnp.zeros_like(sum_acc)
        max_acc[...] = jnp.full_like(max_acc, -jnp.inf)

    if not needs_tail_step:
        # Every step folds a full tile (the common, mask-free case).
        _fold_groups(x_ref, sum_acc, max_acc, g_full)
        _fold_tail(x_ref, sum_acc, max_acc, g_full * _LANES, rem)
    else:
        # Steady state: unmasked full-tile fold.
        @pl.when(k < num_k - 1)
        def _steady():
            _fold_groups(x_ref, sum_acc, max_acc, g_full)

        # Final tile: touch only its statically-known valid lanes
        # (no iota / compare / select anywhere in the kernel).
        last_full = last_valid // _LANES
        last_rem = last_valid % _LANES

        @pl.when(k == num_k - 1)
        def _last():
            _fold_groups(x_ref, sum_acc, max_acc, last_full)
            _fold_tail(x_ref, sum_acc, max_acc, last_full * _LANES, last_rem)

    @pl.when(k == num_k - 1)
    def _finalize():
        inv_hw = jnp.float32(1.0 / hw)
        avg = (jnp.sum(sum_acc[...], axis=1) * inv_hw)[None, :]       # (1, C)
        mx = jnp.max(max_acc[...], axis=1)[None, :]                   # (1, C)
        x2p = pre_ref[0].astype(jnp.float32)                          # (1, C)

        # One fused sharedMLP over the three rows [avg; max; x2].
        stacked = jnp.concatenate([avg, mx, x2p], axis=0)             # (3, C)
        h = jnp.maximum(
            jnp.dot(stacked, w1t_ref[...], preferred_element_type=jnp.float32),
            0.0)                                                      # (3, C//r)
        mlp = jnp.dot(h, w2t_ref[...], preferred_element_type=jnp.float32)  # (3, C)

        out = (coef_ref[0] * mlp[0:1, :]
               + coef_ref[1] * mlp[1:2, :]
               + coef_ref[2] * mlp[2:3, :])                           # (1, C)
        o_ref[0] = jax.nn.sigmoid(out).astype(o_ref.dtype)


def multi_channel_attention_forward(x, scam, w1, w2, wc, bc,
                                    bn_gamma, bn_beta, bn_mean, bn_var,
                                    coef1, coef2, coef3, *, bn_eps=1e-5):
    """x: (B, C, H, W); scam: (B, C, 1, 1); w1: (C//r, C); w2: (C, C//r);
    wc: (C, C) conv weight; bc: (C,) conv bias; bn_*: (C,) BN params."""
    B, C, H, W = x.shape
    HW = H * W
    Cr = w1.shape[0]
    f32 = jnp.float32

    x3 = x.reshape(B, C, HW)                  # native dtype; no f32 copy of x

    # Shallow branch (conv1x1 + eval-mode BatchNorm + ReLU): independent of x
    # and only (B, C) -> compute in the wrapper (XLA fuses it) so the kernel
    # never stages the O(C^2) folded conv weight in VMEM.
    scale = bn_gamma.astype(f32) / jnp.sqrt(bn_var.astype(f32) + bn_eps)     # (C,)
    at = (scale[:, None] * wc.astype(f32)).T                                 # (C, C)
    dvec = scale * (bc.astype(f32) - bn_mean.astype(f32)) + bn_beta.astype(f32)
    x2p = jnp.maximum(scam.reshape(B, C).astype(f32) @ at + dvec, 0.0)       # (B, C)
    x2p = x2p.reshape(B, 1, C)

    w1t = jnp.transpose(w1).astype(f32)       # (C, C//r)
    w2t = jnp.transpose(w2).astype(f32)       # (C//r, C)
    coefs = jnp.stack([coef1, coef2, coef3]).astype(f32).reshape(3)

    tile = _choose_hw_tile(C, HW, jnp.dtype(x.dtype).itemsize)
    num_k = pl.cdiv(HW, tile)

    kernel = functools.partial(_mca_kernel, hw=HW, tile=tile, num_k=num_k)

    out = pl.pallas_call(
        kernel,
        out_shape=jax.ShapeDtypeStruct((B, 1, C), x.dtype),
        grid_spec=pltpu.PrefetchScalarGridSpec(
            num_scalar_prefetch=0,
            grid=(B, num_k),
            in_specs=[
                pl.BlockSpec(memory_space=pltpu.MemorySpace.SMEM),       # coefficients
                pl.BlockSpec((1, C, tile), lambda b, k: (b, 0, k)),      # x (native dtype)
                pl.BlockSpec((1, 1, C), lambda b, k: (b, 0, 0)),         # shallow branch (precomputed)
                pl.BlockSpec((C, Cr), lambda b, k: (0, 0)),              # sharedMLP W1^T
                pl.BlockSpec((Cr, C), lambda b, k: (0, 0)),              # sharedMLP W2^T
            ],
            out_specs=pl.BlockSpec((1, 1, C), lambda b, k: (b, 0, 0)),
            scratch_shapes=[
                pltpu.VMEM((C, _LANES), jnp.float32),    # running sum partials
                pltpu.VMEM((C, _LANES), jnp.float32),    # running max partials
            ],
        ),
        compiler_params=pltpu.CompilerParams(
            dimension_semantics=("parallel", "arbitrary"),
            vmem_limit_bytes=32 * 1024 * 1024,
        ),
    )(coefs, x3, x2p, w1t, w2t)

    return out.reshape(B, C, 1, 1)


def _reference(x, scam, w1, w2, wc, bc, gamma, beta, mean, var, eps, c1, c2, c3):
    """Pure-JAX reference mirroring the PyTorch forward (eval-mode BN)."""
    avg = jnp.mean(x, axis=(2, 3))              # (B, C)
    mx = jnp.max(x, axis=(2, 3))                # (B, C)

    def mlp(v):  # (B, C)
        return jnp.maximum(v @ w1.T, 0.0) @ w2.T

    s = scam.reshape(scam.shape[0], -1)         # (B, C)
    y = s @ wc.T + bc
    y = gamma * (y - mean) / jnp.sqrt(var + eps) + beta
    y = jnp.maximum(y, 0.0)
    out = c1 * mlp(avg) + c2 * mlp(mx) + c3 * mlp(y)
    return jax.nn.sigmoid(out)[:, :, None, None]


if __name__ == "__main__":
    B, C, H, W = 2, 4, 16, 16
    rotio = 2
    key = jax.random.PRNGKey(0)
    keys = jax.random.split(key, 10)

    x = jax.random.normal(keys[0], (B, C, H, W), dtype=jnp.float32)
    scam = jax.random.normal(keys[1], (B, C, 1, 1), dtype=jnp.float32)
    # sharedMLP: Conv2d(C, C//r, 1, bias=False) -> (C//r, C); Conv2d(C//r, C, 1, bias=False) -> (C, C//r)
    w1 = jax.random.normal(keys[2], (C // rotio, C), dtype=jnp.float32) * 0.5
    w2 = jax.random.normal(keys[3], (C, C // rotio), dtype=jnp.float32) * 0.5
    # conv: Conv2d(C, C, 1) with bias
    wc = jax.random.normal(keys[4], (C, C), dtype=jnp.float32) * 0.5
    bc = jax.random.normal(keys[5], (C,), dtype=jnp.float32) * 0.1
    # BatchNorm2d params (eval mode)
    bn_gamma = jnp.abs(jax.random.normal(keys[6], (C,), dtype=jnp.float32)) + 0.5
    bn_beta = jax.random.normal(keys[7], (C,), dtype=jnp.float32) * 0.1
    bn_mean = jax.random.normal(keys[8], (C,), dtype=jnp.float32) * 0.1
    bn_var = jnp.abs(jax.random.normal(keys[9], (C,), dtype=jnp.float32)) + 0.5
    bn_eps = 1e-5
    coef1 = jnp.float32(1.0)
    coef2 = jnp.float32(1.0)
    coef3 = jnp.float32(1.0)

    out = multi_channel_attention_forward(
        x, scam, w1, w2, wc, bc, bn_gamma, bn_beta, bn_mean, bn_var,
        coef1, coef2, coef3, bn_eps=bn_eps)
    out = jax.block_until_ready(out)

    ref = _reference(x, scam, w1, w2, wc, bc, bn_gamma, bn_beta, bn_mean,
                     bn_var, bn_eps, coef1, coef2, coef3)
    assert out.shape == (B, C, 1, 1), out.shape
    assert jnp.allclose(out, ref, atol=1e-5, rtol=1e-5), (
        f"max err {jnp.max(jnp.abs(out - ref))}"
    )
    print("KERNEL_OK")
</pallas_src>

<mosaic_0001>
module attributes {stable_mosaic.version = 11 : i64} {
  func.func @_mca_kernel(%arg0: i32, %arg1: i32, %arg2: memref<3xf32, #tpu.memory_space<smem>>, %arg3: memref<1x4x256xf32, #tpu.memory_space<vmem>>, %arg4: memref<1x1x4xf32, #tpu.memory_space<vmem>>, %arg5: memref<4x2xf32, #tpu.memory_space<vmem>>, %arg6: memref<2x4xf32, #tpu.memory_space<vmem>>, %arg7: memref<1x1x4xf32, #tpu.memory_space<vmem>>, %arg8: memref<4x128xf32, #tpu.memory_space<vmem>>, %arg9: memref<4x128xf32, #tpu.memory_space<vmem>>) attributes {dimension_semantics = [#tpu.dimension_semantics<parallel>, #tpu.dimension_semantics<arbitrary>], iteration_bounds = array<i64: 2, 1>, scalar_prefetch = 0 : i64, scratch_operands = 2 : i64, tpu.core_type = #tpu.core_type<tc>, window_params = [{transform_indices = @transform_0, window_bounds = array<i64: 3>}, {transform_indices = @transform_1, window_bounds = array<i64: 1, 4, 256>}, {transform_indices = @transform_2, window_bounds = array<i64: 1, 1, 4>}, {pipeline_mode = #tpu.pipeline_mode<synchronous>, transform_indices = @transform_3, window_bounds = array<i64: 4, 2>}, {pipeline_mode = #tpu.pipeline_mode<synchronous>, transform_indices = @transform_4, window_bounds = array<i64: 2, 4>}, {transform_indices = @transform_5, window_bounds = array<i64: 1, 1, 4>}]} {
    %c0_i32 = arith.constant 0 : i32
    %0 = arith.cmpi eq, %arg1, %c0_i32 : i32
    %1 = arith.extui %0 : i1 to i32
    %c0_i32_0 = arith.constant 0 : i32
    %2 = arith.cmpi ne, %1, %c0_i32_0 : i32
    scf.if %2 {
      %cst = arith.constant 0.000000e+00 : f32
      %18 = vector.broadcast %cst : f32 to vector<4x128xf32>
      %c0_15 = arith.constant 0 : index
      %c0_16 = arith.constant 0 : index
      %19 = vector.load %arg8[%c0_15, %c0_16] : memref<4x128xf32, #tpu.memory_space<vmem>>, vector<4x128xf32>
      tpu.vector_store %arg8[%c0_15, %c0_16], %18 {strides = array<i32>} : memref<4x128xf32, #tpu.memory_space<vmem>>, vector<4x128xf32>,
      %cst_17 = arith.constant 0xFF800000 : f32
      %20 = vector.broadcast %cst_17 : f32 to vector<4x128xf32>
      %c0_18 = arith.constant 0 : index
      %c0_19 = arith.constant 0 : index
      %21 = vector.load %arg9[%c0_18, %c0_19] : memref<4x128xf32, #tpu.memory_space<vmem>>, vector<4x128xf32>
      tpu.vector_store %arg9[%c0_18, %c0_19], %20 {strides = array<i32>} : memref<4x128xf32, #tpu.memory_space<vmem>>, vector<4x128xf32>,
    } else {
    }
    %c0 = arith.constant 0 : index
    %c0_1 = arith.constant 0 : index
    %3 = vector.load %arg8[%c0, %c0_1] : memref<4x128xf32, #tpu.memory_space<vmem>>, vector<4x128xf32>
    %c0_2 = arith.constant 0 : index
    %c0_3 = arith.constant 0 : index
    %4 = vector.load %arg9[%c0_2, %c0_3] : memref<4x128xf32, #tpu.memory_space<vmem>>, vector<4x128xf32>
    %c0_4 = arith.constant 0 : index
    %c0_5 = arith.constant 0 : index
    %c0_6 = arith.constant 0 : index
    %5 = vector.load %arg3[%c0_4, %c0_5, %c0_6] : memref<1x4x256xf32, #tpu.memory_space<vmem>>, vector<1x4x128xf32>
    %6 = vector.shape_cast %5 : vector<1x4x128xf32> to vector<4x128xf32>
    %7 = arith.addf %3, %6 : vector<4x128xf32>
    %8 = arith.maximumf %4, %6 : vector<4x128xf32>
    %c0_7 = arith.constant 0 : index
    %c0_8 = arith.constant 0 : index
    %c128 = arith.constant 128 : index
    %9 = vector.load %arg3[%c0_7, %c0_8, %c128] : memref<1x4x256xf32, #tpu.memory_space<vmem>>, vector<1x4x128xf32>
    %10 = vector.shape_cast %9 : vector<1x4x128xf32> to vector<4x128xf32>
    %11 = arith.addf %7, %10 : vector<4x128xf32>
    %12 = arith.maximumf %8, %10 : vector<4x128xf32>
    %c0_9 = arith.constant 0 : index
    %c0_10 = arith.constant 0 : index
    %13 = vector.load %arg8[%c0_9, %c0_10] : memref<4x128xf32, #tpu.memory_space<vmem>>, vector<4x128xf32>
    tpu.vector_store %arg8[%c0_9, %c0_10], %11 {strides = array<i32>} : memref<4x128xf32, #tpu.memory_space<vmem>>, vector<4x128xf32>,
    %c0_11 = arith.constant 0 : index
    %c0_12 = arith.constant 0 : index
    %14 = vector.load %arg9[%c0_11, %c0_12] : memref<4x128xf32, #tpu.memory_space<vmem>>, vector<4x128xf32>
    tpu.vector_store %arg9[%c0_11, %c0_12], %12 {strides = array<i32>} : memref<4x128xf32, #tpu.memory_space<vmem>>, vector<4x128xf32>,
    %c0_i32_13 = arith.constant 0 : i32
    %15 = arith.cmpi eq, %arg1, %c0_i32_13 : i32
    %16 = arith.extui %15 : i1 to i32
    %c0_i32_14 = arith.constant 0 : i32
    %17 = arith.cmpi ne, %16, %c0_i32_14 : i32
    scf.if %17 {
      %c0_15 = arith.constant 0 : index
      %c0_16 = arith.constant 0 : index
      %18 = vector.load %arg8[%c0_15, %c0_16] : memref<4x128xf32, #tpu.memory_space<vmem>>, vector<4x128xf32>
      %cst = arith.constant dense<0.000000e+00> : vector<4xf32>
      %19 = vector.multi_reduction <add>, %18, %cst [1] : vector<4x128xf32> to vector<4xf32>
      %cst_17 = arith.constant 3.906250e-03 : f32
      %20 = vector.broadcast %cst_17 : f32 to vector<4xf32>
      %21 = arith.mulf %19, %20 : vector<4xf32>
      %22 = vector.shape_cast %21 : vector<4xf32> to vector<1x4xf32>
      %c0_18 = arith.constant 0 : index
      %c0_19 = arith.constant 0 : index
      %23 = vector.load %arg9[%c0_18, %c0_19] : memref<4x128xf32, #tpu.memory_space<vmem>>, vector<4x128xf32>
      %cst_20 = arith.constant dense<0xFF800000> : vector<4xf32>
      %24 = vector.multi_reduction <maximumf>, %23, %cst_20 [1] : vector<4x128xf32> to vector<4xf32>
      %25 = vector.shape_cast %24 : vector<4xf32> to vector<1x4xf32>
      %c0_21 = arith.constant 0 : index
      %c0_22 = arith.constant 0 : index
      %c0_23 = arith.constant 0 : index
      %26 = vector.load %arg4[%c0_21, %c0_22, %c0_23] : memref<1x1x4xf32, #tpu.memory_space<vmem>>, vector<1x1x4xf32>
      %27 = vector.shape_cast %26 : vector<1x1x4xf32> to vector<1x4xf32>
      %28 = tpu.concatenate %22, %25, %27 in 0 : vector<1x4xf32>, vector<1x4xf32>, vector<1x4xf32> -> vector<3x4xf32>
      %c0_24 = arith.constant 0 : index
      %c0_25 = arith.constant 0 : index
      %29 = vector.load %arg5[%c0_24, %c0_25] : memref<4x2xf32, #tpu.memory_space<vmem>>, vector<4x2xf32>
      %cst_26 = arith.constant dense<0.000000e+00> : vector<3x2xf32>
      %30 = tpu.matmul %28, %29, %cst_26 {dimension_numbers = #tpu.dot_dimension_numbers<[1], [0], [0], [1], [0, 0, 1, 1], [], []>} : vector<3x4xf32>, vector<4x2xf32>, vector<3x2xf32> -> vector<3x2xf32>
      %cst_27 = arith.constant 0.000000e+00 : f32
      %31 = vector.broadcast %cst_27 : f32 to vector<3x2xf32>
      %32 = arith.maximumf %30, %31 : vector<3x2xf32>
      %c0_28 = arith.constant 0 : index
      %c0_29 = arith.constant 0 : index
      %33 = vector.load %arg6[%c0_28, %c0_29] : memref<2x4xf32, #tpu.memory_space<vmem>>, vector<2x4xf32>
      %cst_30 = arith.constant dense<0.000000e+00> : vector<3x4xf32>
      %34 = tpu.matmul %32, %33, %cst_30 {dimension_numbers = #tpu.dot_dimension_numbers<[1], [0], [0], [1], [0, 0, 1, 1], [], []>} : vector<3x2xf32>, vector<2x4xf32>, vector<3x4xf32> -> vector<3x4xf32>
      %c0_31 = arith.constant 0 : index
      %35 = memref.load %arg2[%c0_31] : memref<3xf32, #tpu.memory_space<smem>>
      %36 = vector.extract_strided_slice %34 {offsets = [0, 0], sizes = [1, 4], strides = [1, 1]} : vector<3x4xf32> to vector<1x4xf32>
      %37 = vector.broadcast %35 : f32 to vector<1x4xf32>
      %38 = arith.mulf %37, %36 : vector<1x4xf32>
      %c1 = arith.constant 1 : index
      %39 = memref.load %arg2[%c1] : memref<3xf32, #tpu.memory_space<smem>>
      %40 = vector.extract_strided_slice %34 {offsets = [1, 0], sizes = [1, 4], strides = [1, 1]} : vector<3x4xf32> to vector<1x4xf32>
      %41 = vector.broadcast %39 : f32 to vector<1x4xf32>
      %42 = arith.mulf %41, %40 : vector<1x4xf32>
      %43 = arith.addf %38, %42 : vector<1x4xf32>
      %c2 = arith.constant 2 : index
      %44 = memref.load %arg2[%c2] : memref<3xf32, #tpu.memory_space<smem>>
      %45 = vector.extract_strided_slice %34 {offsets = [2, 0], sizes = [1, 4], strides = [1, 1]} : vector<3x4xf32> to vector<1x4xf32>
      %46 = vector.broadcast %44 : f32 to vector<1x4xf32>
      %47 = arith.mulf %46, %45 : vector<1x4xf32>
      %48 = arith.addf %43, %47 : vector<1x4xf32>
      %49 = arith.negf %48 : vector<1x4xf32>
      %50 = math.exp %49 : vector<1x4xf32>
      %cst_32 = arith.constant 1.000000e+00 : f32
      %51 = vector.broadcast %cst_32 : f32 to vector<1x4xf32>
      %52 = arith.addf %51, %50 : vector<1x4xf32>
      %53 = arith.divf %51, %52 : vector<1x4xf32>
      %c0_33 = arith.constant 0 : index
      %c0_34 = arith.constant 0 : index
      %c0_35 = arith.constant 0 : index
      %54 = vector.load %arg7[%c0_33, %c0_34, %c0_35] : memref<1x1x4xf32, #tpu.memory_space<vmem>>, vector<1x1x4xf32>
      %55 = vector.shape_cast %54 : vector<1x1x4xf32> to vector<1x4xf32>
      %56 = vector.shape_cast %53 : vector<1x4xf32> to vector<1x1x4xf32>
      tpu.vector_store %arg7[%c0_33, %c0_34, %c0_35], %56 {strides = array<i32>} : memref<1x1x4xf32, #tpu.memory_space<vmem>>, vector<1x1x4xf32>,
    } else {
    }
    return
  }
  func.func @transform_0(%arg0: i32, %arg1: i32) -> i32 {
    %c0_i32 = arith.constant 0 : i32
    %c0_i32_0 = arith.constant 0 : i32
    return %c0_i32 : i32
  }
  func.func @transform_1(%arg0: i32, %arg1: i32) -> (i32, i32, i32) {
    %c0_i32 = arith.constant 0 : i32
    %c0_i32_0 = arith.constant 0 : i32
    return %arg0, %c0_i32, %arg1 : i32, i32, i32
  }
  func.func @transform_2(%arg0: i32, %arg1: i32) -> (i32, i32, i32) {
    %c0_i32 = arith.constant 0 : i32
    %c0_i32_0 = arith.constant 0 : i32
    %c0_i32_1 = arith.constant 0 : i32
    return %arg0, %c0_i32, %c0_i32_0 : i32, i32, i32
  }
  func.func @transform_3(%arg0: i32, %arg1: i32) -> (i32, i32) {
    %c0_i32 = arith.constant 0 : i32
    %c0_i32_0 = arith.constant 0 : i32
    %c0_i32_1 = arith.constant 0 : i32
    return %c0_i32, %c0_i32_0 : i32, i32
  }
  func.func @transform_4(%arg0: i32, %arg1: i32) -> (i32, i32) {
    %c0_i32 = arith.constant 0 : i32
    %c0_i32_0 = arith.constant 0 : i32
    %c0_i32_1 = arith.constant 0 : i32
    return %c0_i32, %c0_i32_0 : i32, i32
  }
  func.func @transform_5(%arg0: i32, %arg1: i32) -> (i32, i32, i32) {
    %c0_i32 = arith.constant 0 : i32
    %c0_i32_0 = arith.constant 0 : i32
    %c0_i32_1 = arith.constant 0 : i32
    return %arg0, %c0_i32, %c0_i32_0 : i32, i32, i32
  }
}

</mosaic_0001>

<llo_original>
// kernel: tpu_custom_call.1
$region0: #{tpu_custom_call.1}
  #allocation0 [shape = 'u32[]', space=smem, size = 0x4, offset = 0x4, fixed_abs, tag = 'smem constant byte address 0x4 - core index']
  #allocation1 [shape = 'u32[144,128]{1,0:T(1,128)}', space=vmem, size = 0x12000, scoped, tag = 'internal scratch']
  #allocation2 [shape = 'f32[4,128]{1,0:T(4,128)}', space=vmem, size = 0x800, scoped, tag = 'scratch operand']
  #allocation3 [shape = 'f32[4,128]{1,0:T(4,128)}', space=vmem, size = 0x800, scoped, tag = 'scratch operand']
  %s0 = inlined_call_operand.vmem [shape: f32[3], index: 0, kind: input, shape index: {}]
  %s1 = inlined_call_operand.hbm [shape: f32[2,4,256], index: 1, kind: input, shape index: {}]
  %s2 = inlined_call_operand.vmem [shape: f32[2,1,4], index: 2, kind: input, shape index: {}]
  %s3 = inlined_call_operand.vmem [shape: f32[4,2], index: 3, kind: input, shape index: {}]
  %s4 = inlined_call_operand.vmem [shape: f32[2,4], index: 4, kind: input, shape index: {}]
  %s5 = inlined_call_operand.hbm [shape: f32[2,1,4], index: 5, kind: output, shape index: {}]
  %s6 = sld [smem:[#allocation0]]
  $region69: #{tpu_custom_call.1} parent=0
    _
  %s8 = ssub.s32 1, %s6
  %s9 = scalar_select 0, %s8, %s6
  $region1: #{tpu_custom_call.1} parent=0
    #allocation4 [shape = 'u8[512]{0}', space=smem, size = 0x200, scoped, tag = 'input window, operand 0, single buffered']
    #allocation5 [shape = 's32[2]{0}', space=sflag, size = 0x8, scoped, tag = 'scoped memory for tpu_custom_call.1']
    #allocation6 [shape = 's32[2]{0}', space=sflag, size = 0x8, scoped, tag = 'scoped memory for tpu_custom_call.1']
    #allocation7 [shape = 's32[2]{0}', space=sflag, size = 0x8, scoped, tag = 'scoped memory for tpu_custom_call.1']
    #allocation8 [shape = 'u8[8192]{0}', space=vmem, size = 0x2000, scoped, tag = 'input window, operand 1']
    #allocation9 [shape = 'u8[1024]{0}', space=vmem, size = 0x400, scoped, tag = 'output window, operand 0']
    %10 = vsyncpa [#allocation7], 0
    %11 = vsyncpa [#allocation5], 0
    %s12 = scalar_lea.sflag [#allocation5], 1
    %13 = vsyncpa %s12, 0
    %14 = vsyncpa [#allocation6], 0
    %s15 = scalar_lea.sflag [#allocation6], 1
    %16 = vsyncpa %s15, 0
    loop: start=0, step=1, limit=4
    $region2: #{tpu_custom_call.1} parent=1 // loop_pre_header
      _
    $region3: #{tpu_custom_call.1} parent=1 // loop_header
      %s18 = sphi 0, %s22
      %p19 = scmp.ge.s32.totalorder %s18, 4
      %s25 = sphi 0, %s37
      %s26 = sphi 0, %s33
      %s27 = sphi 0, %s25
      %s28 = sphi 0, %s26
      %s29 = sphi 0, %s27
      %s30 = sphi 0, %s28
      %s38 = sphi 0, %s38
      %s40 = sphi 0, %s38
      %s41 = sphi 0, %s40
      %s55 = sphi 0, %s41
      %s63 = sphi 0, %s65
      %s66 = sphi 0, %s63
      %s67 = sphi 0, %s66
      %s83 = sphi 0, %s67
      %s89 = sphi 0, %s91
      %s92 = sphi 0, %s89
      %s93 = sphi 0, %s92
      %s109 = sphi 0, %s93
      %s113 = sphi 0, %s113
      %s115 = sphi 0, %s113
      %s116 = sphi 0, %s115
      %s130 = sphi 0, %s116
      %s134 = sphi 0, %s134
      %s136 = sphi 0, %s134
      %s137 = sphi 0, %s136
      %s151 = sphi 0, %s137
      %s157 = sphi 0, %s159
      %s160 = sphi 0, %s157
      %s161 = sphi 0, %s160
      %s177 = sphi 0, %s161
    $region4: #{tpu_custom_call.1} parent=1 // loop_header_branch
      %21 = sbr.rel (%p19) target = $region8
    $region5: #{tpu_custom_call.1} parent=1 // loop_body
      %s23 = ssub.s32 %s18, 1
      %s24 = ssub.s32 %s18, 2
      %s31 = sadd.s32 1, %s26
      %p32 = scmp.ge.s32.totalorder %s31, 1
      %s33 = scalar_select %p32, 0, %s31
      %s34 = sadd.s32 1, %s25
      %s35 = scalar_select %p32, %s34, %s25
      %p36 = scmp.ge.s32.totalorder %s35, 2
      %s37 = scalar_select %p36, 0, %s35
      %s39 = sadd.s32 %s38, 1
      %p42 = scmp.eq.s32.totalorder %s18, 1
      %p43 = scmp.ne.s32.totalorder %s38, %s40
      %p44 = scmp.eq.s32.totalorder %s18, 0
      %p45 = por %p43, %p44
      %p46 = scmp.ne.s32.totalorder %s38, %s40
      %p47 = scmp.eq.s32.totalorder %s23, 1
      %p48 = por %p46, %p47
      %p49 = scmp.ne.s32.totalorder %s40, %s41
      %p50 = scmp.eq.s32.totalorder %s23, 0
      %p51 = por %p49, %p50
      %p52 = scmp.ne.s32.totalorder %s40, %s41
      %p53 = scmp.eq.s32.totalorder %s24, 1
      %p54 = por %p52, %p53
      %p56 = scmp.ne.s32.totalorder %s41, %s55
      %p57 = scmp.eq.s32.totalorder %s24, 0
      %p58 = por %p56, %p57
      %s59 = ssub.s32 %s25, %s37
      %s60 = ssub.s32 %s26, %s33
      %s61 = sor.u32 %s59, %s60
      %p62 = scmp.eq.s32.totalorder %s61, 0
      %s64 = sadd.s32 %s63, 1
      %s65 = scalar_select %p62, %s63, %s64
      %p68 = pneg %p62
      %p69 = scmp.eq.s32.totalorder %s18, 1
      %p70 = por %p68, %p69
      %p71 = scmp.ne.s32.totalorder %s63, %s66
      %p72 = scmp.eq.s32.totalorder %s18, 0
      %p73 = por %p71, %p72
      %p74 = scmp.ne.s32.totalorder %s63, %s66
      %p75 = scmp.eq.s32.totalorder %s23, 1
      %p76 = por %p74, %p75
      %p77 = scmp.ne.s32.totalorder %s66, %s67
      %p78 = scmp.eq.s32.totalorder %s23, 0
      %p79 = por %p77, %p78
      %p80 = scmp.ne.s32.totalorder %s66, %s67
      %p81 = scmp.eq.s32.totalorder %s24, 1
      %p82 = por %p80, %p81
      %p84 = scmp.ne.s32.totalorder %s67, %s83
      %p85 = scmp.eq.s32.totalorder %s24, 0
      %p86 = por %p84, %p85
      %s87 = ssub.s32 %s25, %s37
      %p88 = scmp.eq.s32.totalorder %s87, 0
      %s90 = sadd.s32 %s89, 1
      %s91 = scalar_select %p88, %s89, %s90
      %p94 = pneg %p88
      %p95 = scmp.eq.s32.totalorder %s18, 1
      %p96 = por %p94, %p95
      %p97 = scmp.ne.s32.totalorder %s89, %s92
      %p98 = scmp.eq.s32.totalorder %s18, 0
      %p99 = por %p97, %p98
      %p100 = scmp.ne.s32.totalorder %s89, %s92
      %p101 = scmp.eq.s32.totalorder %s23, 1
      %p102 = por %p100, %p101
      %p103 = scmp.ne.s32.totalorder %s92, %s93
      %p104 = scmp.eq.s32.totalorder %s23, 0
      %p105 = por %p103, %p104
      %p106 = scmp.ne.s32.totalorder %s92, %s93
      %p107 = scmp.eq.s32.totalorder %s24, 1
      %p108 = por %p106, %p107
      %p110 = scmp.ne.s32.totalorder %s93, %s109
      %p111 = scmp.eq.s32.totalorder %s24, 0
      %p112 = por %p110, %p111
      %s114 = sadd.s32 %s113, 1
      %p117 = scmp.eq.s32.totalorder %s18, 1
      %p118 = scmp.ne.s32.totalorder %s113, %s115
      %p119 = scmp.eq.s32.totalorder %s18, 0
      %p120 = por %p118, %p119
      %p121 = scmp.ne.s32.totalorder %s113, %s115
      %p122 = scmp.eq.s32.totalorder %s23, 1
      %p123 = por %p121, %p122
      %p124 = scmp.ne.s32.totalorder %s115, %s116
      %p125 = scmp.eq.s32.totalorder %s23, 0
      %p126 = por %p124, %p125
      %p127 = scmp.ne.s32.totalorder %s115, %s116
      %p128 = scmp.eq.s32.totalorder %s24, 1
      %p129 = por %p127, %p128
      %p131 = scmp.ne.s32.totalorder %s116, %s130
      %p132 = scmp.eq.s32.totalorder %s24, 0
      %p133 = por %p131, %p132
      %s135 = sadd.s32 %s134, 1
      %p138 = scmp.eq.s32.totalorder %s18, 1
      %p139 = scmp.ne.s32.totalorder %s134, %s136
      %p140 = scmp.eq.s32.totalorder %s18, 0
      %p141 = por %p139, %p140
      %p142 = scmp.ne.s32.totalorder %s134, %s136
      %p143 = scmp.eq.s32.totalorder %s23, 1
      %p144 = por %p142, %p143
      %p145 = scmp.ne.s32.totalorder %s136, %s137
      %p146 = scmp.eq.s32.totalorder %s23, 0
      %p147 = por %p145, %p146
      %p148 = scmp.ne.s32.totalorder %s136, %s137
      %p149 = scmp.eq.s32.totalorder %s24, 1
      %p150 = por %p148, %p149
      %p152 = scmp.ne.s32.totalorder %s137, %s151
      %p153 = scmp.eq.s32.totalorder %s24, 0
      %p154 = por %p152, %p153
      %s155 = ssub.s32 %s25, %s37
      %p156 = scmp.eq.s32.totalorder %s155, 0
      %s158 = sadd.s32 %s157, 1
      %s159 = scalar_select %p156, %s157, %s158
      %p162 = pneg %p156
      %p163 = scmp.eq.s32.totalorder %s18, 1
      %p164 = por %p162, %p163
      %p165 = scmp.ne.s32.totalorder %s157, %s160
      %p166 = scmp.eq.s32.totalorder %s18, 0
      %p167 = por %p165, %p166
      %p168 = scmp.ne.s32.totalorder %s157, %s160
      %p169 = scmp.eq.s32.totalorder %s23, 1
      %p170 = por %p168, %p169
      %p171 = scmp.ne.s32.totalorder %s160, %s161
      %p172 = scmp.eq.s32.totalorder %s23, 0
      %p173 = por %p171, %p172
      %p174 = scmp.ne.s32.totalorder %s160, %s161
      %p175 = scmp.eq.s32.totalorder %s24, 1
      %p176 = por %p174, %p175
      %p178 = scmp.ne.s32.totalorder %s161, %s177
      %p179 = scmp.eq.s32.totalorder %s24, 0
      %p180 = por %p178, %p179
      %p181 = scmp.le.s32.totalorder 1, %s18
      %p182 = scmp.lt.s32.totalorder %s18, 3
      %p183 = pnand %p181, %p182
      %p184 = pneg %p183
      // Predicated region
      $region9: #{tpu_custom_call.1} parent=5 // pred_check
        _
      $region10: #{tpu_custom_call.1} parent=5 // pred_check_branch
        %186 = sbr.rel (%p183) target = $region12
      $region11: #{tpu_custom_call.1} parent=5 // pred_region
        %s187 = ssub.s32 %s18, 1
        // Predicated region
        $region13: #{tpu_custom_call.1} parent=11 // pred_check
          %p188 = pneg %p51
        $region14: #{tpu_custom_call.1} parent=11 // pred_check_branch
          %190 = sbr.rel (%p188) target = $region16
        $region15: #{tpu_custom_call.1} parent=11 // pred_region
          %s192 = ssub.s32 16, 16
          %193 = vsyncadd [#allocation7], %s192
          %s195 = sshll.u32 %s0, 4
          %s196 = int_to_ptr.vmem [resolvable:$true] %s195
          %198 = dma.vmem_to_smem %s196, 16, [#allocation4], [#allocation7]
        $region16: #{tpu_custom_call.1} parent=11 // pred_fallthru
          _
        // Predicated region
        $region17: #{tpu_custom_call.1} parent=11 // pred_check
          %p199 = pneg %p126
        $region18: #{tpu_custom_call.1} parent=11 // pred_check_branch
          %201 = sbr.rel (%p199) target = $region20
        $region19: #{tpu_custom_call.1} parent=11 // pred_region
          _
        $region20: #{tpu_custom_call.1} parent=11 // pred_fallthru
          _
        // Predicated region
        $region21: #{tpu_custom_call.1} parent=11 // pred_check
          %p202 = pneg %p147
        $region22: #{tpu_custom_call.1} parent=11 // pred_check_branch
          %204 = sbr.rel (%p202) target = $region24
        $region23: #{tpu_custom_call.1} parent=11 // pred_region
          _
        $region24: #{tpu_custom_call.1} parent=11 // pred_fallthru
          _
      $region12: #{tpu_custom_call.1} parent=5 // pred_fallthru
        _
      %p205 = scmp.lt.s32.totalorder %s18, 2
      // Predicated region
      $region25: #{tpu_custom_call.1} parent=5 // pred_check
        %p206 = pneg %p205
      $region26: #{tpu_custom_call.1} parent=5 // pred_check_branch
        %208 = sbr.rel (%p206) target = $region28
      $region27: #{tpu_custom_call.1} parent=5 // pred_region
        // Predicated region
        $region29: #{tpu_custom_call.1} parent=27 // pred_check
          %p209 = pneg %p73
        $region30: #{tpu_custom_call.1} parent=27 // pred_check_branch
          %211 = sbr.rel (%p209) target = $region32
        $region31: #{tpu_custom_call.1} parent=27 // pred_region
          %s212 = sand.u32 %s63, 1
          %s213 = scalar_lea.sflag [#allocation5], %s212
          %s214 = sand.u32 %s63, 1
          %s215 = smul.addr %s214, 8
          %s216 = scalar_lea.vmem [#allocation8], %s215
          %s217 = smul.u32 2, %s26
          %s219 = ssub.s32 128, 128
          %220 = vsyncadd %s213, %s219
          %s221 = smul.addr %s25, 2
          %s222 = sadd.s32 %s217, %s221
          %s223 = smul.addr %s222, 64
          %s224 = scalar_lea.hbm %s1, %s223
          %s226 = sshll.u32 %s216, 4
          %s227 = int_to_ptr.vmem [resolvable:$true] %s226
          %229 = dma.hbm_to_vmem [thread:$0]  %s224, 128, %s227, %s213
        $region32: #{tpu_custom_call.1} parent=27 // pred_fallthru
          _
        // Predicated region
        $region33: #{tpu_custom_call.1} parent=27 // pred_check
          %p230 = pneg %p99
        $region34: #{tpu_custom_call.1} parent=27 // pred_check_branch
          %232 = sbr.rel (%p230) target = $region36
        $region35: #{tpu_custom_call.1} parent=27 // pred_region
          %p233 = scmp.lt.s32.totalorder %s25, 1
          %s234 = scalar_select %p233, %s25, 1
          %s235 = scalar_lea.vmem %s2, %s234
        $region36: #{tpu_custom_call.1} parent=27 // pred_fallthru
          _
      $region28: #{tpu_custom_call.1} parent=5 // pred_fallthru
        _
      %p236 = scmp.le.s32.totalorder 1, %s18
      %p237 = scmp.lt.s32.totalorder %s18, 3
      %p238 = pnand %p236, %p237
      %p239 = pneg %p238
      // Predicated region
      $region37: #{tpu_custom_call.1} parent=5 // pred_check
        _
      $region38: #{tpu_custom_call.1} parent=5 // pred_check_branch
        %241 = sbr.rel (%p238) target = $region40
      $region39: #{tpu_custom_call.1} parent=5 // pred_region
        %s242 = ssub.s32 %s18, 1
        // Predicated region
        $region41: #{tpu_custom_call.1} parent=39 // pred_check
          %p243 = pneg %p51
        $region42: #{tpu_custom_call.1} parent=39 // pred_check_branch
          %245 = sbr.rel (%p243) target = $region44
        $region43: #{tpu_custom_call.1} parent=39 // pred_region
          %246 = dma.done [#allocation7], 16
        $region44: #{tpu_custom_call.1} parent=39 // pred_fallthru
          _
        %s247 = sand.u32 %s66, 1
        %s248 = scalar_lea.sflag [#allocation5], %s247
        %s249 = sand.u32 %s66, 1
        %s250 = smul.addr %s249, 8
        %s251 = scalar_lea.vmem [#allocation8], %s250
        // Predicated region
        $region45: #{tpu_custom_call.1} parent=39 // pred_check
          %p252 = pneg %p79
        $region46: #{tpu_custom_call.1} parent=39 // pred_check_branch
          %254 = sbr.rel (%p252) target = $region48
        $region47: #{tpu_custom_call.1} parent=39 // pred_region
          %255 = dma.done %s248, 128
        $region48: #{tpu_custom_call.1} parent=39 // pred_fallthru
          _
        %256 = sfence
        %p257 = pneg %p51
        %p258 = pneg %p48
        %s259 = sand.u32 %s66, 1
        %s260 = scalar_lea.sflag [#allocation5], %s259
        %s261 = sand.u32 %s66, 1
        %s262 = smul.addr %s261, 8
        %s263 = scalar_lea.vmem [#allocation8], %s262
        %p264 = pneg %p79
        %p265 = pneg %p76
        %p266 = scmp.lt.s32.totalorder %s27, 1
        %s267 = scalar_select %p266, %s27, 1
        %s268 = scalar_lea.vmem %s2, %s267
        %p269 = pneg %p105
        %p270 = pneg %p102
        %p271 = pneg %p126
        %p272 = pneg %p123
        %p273 = pneg %p147
        %p274 = pneg %p144
        %p275 = pneg %p173
        %p276 = pneg %p170
        %s277 = sand.u32 %s160, 1
        %s278 = scalar_lea.sflag [#allocation6], %s277
        %s279 = sand.u32 %s160, 1
        %s280 = scalar_lea.vmem [#allocation9], %s279
        %s281 = smul.u32 2, %s28
        %p282 = scmp.lt.s32.totalorder %s27, 1
        %s283 = scalar_select %p282, %s27, 1
        %s284 = scalar_lea.vmem %s2, %s283
        %p285 = scmp.eq.s32.totalorder %s28, 0
        // Predicated region
        $region49: #{tpu_custom_call.1} parent=39 // pred_check
          %p286 = pneg %p285
        $region50: #{tpu_custom_call.1} parent=39 // pred_check_branch
          %288 = sbr.rel (%p286) target = $region52
        $region51: #{tpu_custom_call.1} parent=39 // pred_region
          %289 = vst [vmem:[#allocation2] sm:$0xf] 0.0
          %290 = vst [vmem:[#allocation3] sm:$0xf] -inf
        $region52: #{tpu_custom_call.1} parent=39 // pred_fallthru
          _
        %v291 = vld [vmem:[#allocation2] sm:$0xf]
        %v292 = vld [vmem:[#allocation3] sm:$0xf]
        %v293 = vld [vmem:[%s251] sm:$0xf]
        %v294 = vadd.f32 %v291, %v293
        %v295 = vmax.f32 %v292, %v293
        %v296 = vld [vmem:[%s251 + $0x4] sm:$0xf]
        %v297 = vadd.f32 %v294, %v296
        %v298 = vmax.f32 %v295, %v296
        %299 = vst [vmem:[#allocation2] sm:$0xf] %v297
        %300 = vst [vmem:[#allocation3] sm:$0xf] %v298
        // Predicated region
        $region53: #{tpu_custom_call.1} parent=39 // pred_check
          %p301 = pneg %p285
        $region54: #{tpu_custom_call.1} parent=39 // pred_check_branch
          %303 = sbr.rel (%p301) target = $region56
        $region55: #{tpu_custom_call.1} parent=39 // pred_region
          %v304 = vld [vmem:[#allocation2] sm:$0xf]
          %vm305 = vcmask 1043456
          %v306 = vsel %vm305, %v304, 0.0
          %307 = vadd.xlane.f32.xlu0 %v306
          %v308 = vpop.xlane.xlu0 %307
          %v309 = vmul.f32 %v308, 0.00390625
          %v310 = vld [vmem:[#allocation3] sm:$0xf]
          %v311 = vsel %vm305, %v310, -inf
          %312 = vmax.xlane.f32.xlu0 %v311
          %v313 = vpop.xlane.xlu0 %312
          %v314 = vld [vmem:[%s284] sm:$0x1]
          %v316 = vlaneseq
          %v317 = vand.u32 %v316, 127
          %v318 = vlaneseq
          %v319 = vshrl.u32 %v318, 7
          %v320 = vsub.s32 %v317, %v319
          %v321 = vrot.slane %v309, %v320
          %v324 = vlaneseq
          %v325 = vshrl.u32 %v324, 7
          %v326 = vsub.s32 %v317, %v325
          %v327 = vrot.slane %v313, %v326
          %v330 = vlaneseq
          %v331 = vshrl.u32 %v330, 7
          %v332 = vsub.s32 0, %v331
          %v333 = vrot.slane %v314, %v332
          %vm335 = vcmask 1040384
          %v336 = vsel %vm335, %v321, %v327
          %vm337 = vcmask 1041408
          %v338 = vsel %vm337, %v336, %v333
          %v339 = vld [vmem:[%s3] sm:$0xf]
          %vm340 = vcmask 31744
          %v342 = vsel %vm340, %v338, 0
          %v345 = vsel %vm305, %v339, 0
          %347 = vmatprep.subr.mxu0 0.0
          %348 = vmatpush1.msra.mxu0 %v345
          %349 = vmatprep.subr.mxu0 0.0
          %350 = vmatpush1.msra.mxu0 0.0
          %351 = vmatprep.subr.mxu0 0.0
          %352 = vmatpush1.msra.mxu0 0.0
          %353 = vmatprep.subr.mxu0 0.0
          %354 = vmatpush1.msra.mxu0 0.0
          %355 = vmatprep.subr.mxu0 0.0
          %356 = vmatpush1.msra.mxu0 0.0
          %357 = vmatprep.subr.mxu0 0.0
          %358 = vmatpush1.msra.mxu0 0.0
          %359 = vmatprep.subr.mxu0 0.0
          %360 = vmatpush1.msra.mxu0 0.0
          %361 = vmatprep.subr.mxu0 0.0
          %362 = vmatpush1.msra.mxu0 0.0
          %363 = vmatprep.subr.mxu0 0.0
          %364 = vmatpush1.msra.mxu0 0.0
          %365 = vmatprep.subr.mxu0 0.0
          %366 = vmatpush1.msra.mxu0 0.0
          %367 = vmatprep.subr.mxu0 0.0
          %368 = vmatpush1.msra.mxu0 0.0
          %369 = vmatprep.subr.mxu0 0.0
          %370 = vmatpush1.msra.mxu0 0.0
          %371 = vmatprep.subr.mxu0 0.0
          %372 = vmatpush1.msra.mxu0 0.0
          %373 = vmatprep.subr.mxu0 0.0
          %374 = vmatpush1.msra.mxu0 0.0
          %375 = vmatprep.subr.mxu0 0.0
          %376 = vmatpush1.msra.mxu0 0.0
          %377 = vmatprep.subr.mxu0 0.0
          %378 = vmatpush1.msra.mxu0 0.0
          %379 = vmatprep.subr.mxu0 0.0
          %380 = vmatpush1.msra.mxu0 0.0
          %381 = vmatprep.subr.mxu0 0.0
          %382 = vmatpush1.msra.mxu0 0.0
          %383 = vmatprep.subr.mxu0 0.0
          %384 = vmatpush1.msra.mxu0 0.0
          %385 = vmatprep.subr.mxu0 0.0
          %386 = vmatpush1.msra.mxu0 0.0
          %387 = vmatprep.subr.mxu0 0.0
          %388 = vmatpush1.msra.mxu0 0.0
          %389 = vmatprep.subr.mxu0 0.0
          %390 = vmatpush1.msra.mxu0 0.0
          %391 = vmatprep.subr.mxu0 0.0
          %392 = vmatpush1.msra.mxu0 0.0
          %393 = vmatprep.subr.mxu0 0.0
          %394 = vmatpush1.msra.mxu0 0.0
          %395 = vmatprep.subr.mxu0 0.0
          %396 = vmatpush1.msra.mxu0 0.0
          %397 = vmatprep.subr.mxu0 0.0
          %398 = vmatpush1.msra.mxu0 0.0
          %399 = vmatprep.subr.mxu0 0.0
          %400 = vmatpush1.msra.mxu0 0.0
          %401 = vmatprep.subr.mxu0 0.0
          %402 = vmatpush1.msra.mxu0 0.0
          %403 = vmatprep.subr.mxu0 0.0
          %404 = vmatpush1.msra.mxu0 0.0
          %405 = vmatprep.subr.mxu0 0.0
          %406 = vmatpush1.msra.mxu0 0.0
          %407 = vmatprep.subr.mxu0 0.0
          %408 = vmatpush1.msra.mxu0 0.0
          %409 = vmatprep.subr.mxu0 0.0
          %410 = vmatpush1.msra.mxu0 0.0
          %411 = vmatprep.mubr.f32.mxu0 0.0
          %412 = vmatmul.mubr.f32.gmra.mrb[0].mxu0 %v342
          %v413 = vpop.f32.mrb[0].mxu0
          %v414 = vadd.f32 0.0, %v413
          %v415 = vpop.f32.mrb[0].mxu0
          %416 = vdwg.mxu0
          %v417 = vmax.f32 %v414, 0.0
          %v418 = vld [vmem:[%s4] sm:$0x3]
          %vm419 = vcmask 15360
          %v421 = vsel %vm419, %v417, 0
          %v424 = vsel %vm337, %v418, 0
          %426 = vmatprep.subr.mxu0 0.0
          %427 = vmatpush1.msra.mxu0 %v424
          %428 = vmatprep.subr.mxu0 0.0
          %429 = vmatpush1.msra.mxu0 0.0
          %430 = vmatprep.subr.mxu0 0.0
          %431 = vmatpush1.msra.mxu0 0.0
          %432 = vmatprep.subr.mxu0 0.0
          %433 = vmatpush1.msra.mxu0 0.0
          %434 = vmatprep.subr.mxu0 0.0
          %435 = vmatpush1.msra.mxu0 0.0
          %436 = vmatprep.subr.mxu0 0.0
          %437 = vmatpush1.msra.mxu0 0.0
          %438 = vmatprep.subr.mxu0 0.0
          %439 = vmatpush1.msra.mxu0 0.0
          %440 = vmatprep.subr.mxu0 0.0
          %441 = vmatpush1.msra.mxu0 0.0
          %442 = vmatprep.subr.mxu0 0.0
          %443 = vmatpush1.msra.mxu0 0.0
          %444 = vmatprep.subr.mxu0 0.0
          %445 = vmatpush1.msra.mxu0 0.0
          %446 = vmatprep.subr.mxu0 0.0
          %447 = vmatpush1.msra.mxu0 0.0
          %448 = vmatprep.subr.mxu0 0.0
          %449 = vmatpush1.msra.mxu0 0.0
          %450 = vmatprep.subr.mxu0 0.0
          %451 = vmatpush1.msra.mxu0 0.0
          %452 = vmatprep.subr.mxu0 0.0
          %453 = vmatpush1.msra.mxu0 0.0
          %454 = vmatprep.subr.mxu0 0.0
          %455 = vmatpush1.msra.mxu0 0.0
          %456 = vmatprep.subr.mxu0 0.0
          %457 = vmatpush1.msra.mxu0 0.0
          %458 = vmatprep.subr.mxu0 0.0
          %459 = vmatpush1.msra.mxu0 0.0
          %460 = vmatprep.subr.mxu0 0.0
          %461 = vmatpush1.msra.mxu0 0.0
          %462 = vmatprep.subr.mxu0 0.0
          %463 = vmatpush1.msra.mxu0 0.0
          %464 = vmatprep.subr.mxu0 0.0
          %465 = vmatpush1.msra.mxu0 0.0
          %466 = vmatprep.subr.mxu0 0.0
          %467 = vmatpush1.msra.mxu0 0.0
          %468 = vmatprep.subr.mxu0 0.0
          %469 = vmatpush1.msra.mxu0 0.0
          %470 = vmatprep.subr.mxu0 0.0
          %471 = vmatpush1.msra.mxu0 0.0
          %472 = vmatprep.subr.mxu0 0.0
          %473 = vmatpush1.msra.mxu0 0.0
          %474 = vmatprep.subr.mxu0 0.0
          %475 = vmatpush1.msra.mxu0 0.0
          %476 = vmatprep.subr.mxu0 0.0
          %477 = vmatpush1.msra.mxu0 0.0
          %478 = vmatprep.subr.mxu0 0.0
          %479 = vmatpush1.msra.mxu0 0.0
          %480 = vmatprep.subr.mxu0 0.0
          %481 = vmatpush1.msra.mxu0 0.0
          %482 = vmatprep.subr.mxu0 0.0
          %483 = vmatpush1.msra.mxu0 0.0
          %484 = vmatprep.subr.mxu0 0.0
          %485 = vmatpush1.msra.mxu0 0.0
          %486 = vmatprep.subr.mxu0 0.0
          %487 = vmatpush1.msra.mxu0 0.0
          %488 = vmatprep.subr.mxu0 0.0
          %489 = vmatpush1.msra.mxu0 0.0
          %490 = vmatprep.mubr.f32.mxu0 0.0
          %491 = vmatmul.mubr.f32.gmra.mrb[0].mxu0 %v421
          %v492 = vpop.f32.mrb[0].mxu0
          %v493 = vadd.f32 0.0, %v492
          %v494 = vpop.f32.mrb[0].mxu0
          %495 = vdwg.mxu0
          %s496 = sld [smem:[#allocation4]]
          %v497 = vstv %s496
          %v498 = vmul.f32 %v497, %v493
          %s499 = sld [smem:[#allocation4 + $0x1]]
          %v500 = vstv %s499
          %v501 = vmul.f32 %v500, %v493
          %v503 = vrot.slane %v501, 1
          %v505 = vadd.f32 %v498, %v503
          %s506 = sld [smem:[#allocation4 + $0x2]]
          %v507 = vstv %s506
          %v508 = vmul.f32 %v507, %v493
          %v510 = vrot.slane %v508, 2
          %v512 = vadd.f32 %v505, %v510
          %v513 = vxor.u32 %v512, 2147483648
          %v514 = vmul.f32 %v513, 1.442695
          %v515 = vpow.pop %v514
          %v516 = vadd.f32 %v515, 1.0
          %v517 = vrcp.pop %v516
          %v518 = vmul.f32 1.0, %v517
          %vm519 = vcmask 24576
          %520 = vst.msk [vmem:[%s280] sm:$0x1] %vm519, %v518
        $region56: #{tpu_custom_call.1} parent=39 // pred_fallthru
          _
        %s521 = sand.u32 %s160, 1
        %s522 = scalar_lea.sflag [#allocation6], %s521
        %s523 = sand.u32 %s160, 1
        %s524 = scalar_lea.vmem [#allocation9], %s523
        // Predicated region
        $region57: #{tpu_custom_call.1} parent=39 // pred_check
          %p525 = pneg %p170
        $region58: #{tpu_custom_call.1} parent=39 // pred_check_branch
          %527 = sbr.rel (%p525) target = $region60
        $region59: #{tpu_custom_call.1} parent=39 // pred_region
          %s529 = ssub.s32 16, 16
          %530 = vsyncadd %s522, %s529
          %s531 = smul.addr %s27, 16
          %s532 = scalar_lea.hbm %s5, %s531
          %s534 = sshll.u32 %s524, 4
          %s535 = int_to_ptr.vmem [resolvable:$true] %s534
          %537 = dma.vmem_to_hbm [thread:$0]  %s535, 16, %s532, %s522
        $region60: #{tpu_custom_call.1} parent=39 // pred_fallthru
          _
      $region40: #{tpu_custom_call.1} parent=5 // pred_fallthru
        _
      %p538 = scmp.le.s32.totalorder 2, %s18
      // Predicated region
      $region61: #{tpu_custom_call.1} parent=5 // pred_check
        %p539 = pneg %p538
      $region62: #{tpu_custom_call.1} parent=5 // pred_check_branch
        %541 = sbr.rel (%p539) target = $region64
      $region63: #{tpu_custom_call.1} parent=5 // pred_region
        %s542 = ssub.s32 %s18, 2
        // Predicated region
        $region65: #{tpu_custom_call.1} parent=63 // pred_check
          %p543 = pneg %p176
        $region66: #{tpu_custom_call.1} parent=63 // pred_check_branch
          %545 = sbr.rel (%p543) target = $region68
        $region67: #{tpu_custom_call.1} parent=63 // pred_region
          %s546 = sand.u32 %s161, 1
          %s547 = scalar_lea.sflag [#allocation6], %s546
          %s548 = sand.u32 %s161, 1
          %s549 = scalar_lea.vmem [#allocation9], %s548
          %550 = dma.done %s547, 16
        $region68: #{tpu_custom_call.1} parent=63 // pred_fallthru
          _
      $region64: #{tpu_custom_call.1} parent=5 // pred_fallthru
        _
    $region6: #{tpu_custom_call.1} parent=1 // loop_footer
      %s22 = sadd.s32 1, %s18
    $region7: #{tpu_custom_call.1} parent=1 // loop_footer_branch
      %17 = sbr.rel target = $region3
    $region8: #{tpu_custom_call.1} parent=1 // loop_exit
      _
    %551 = vsyncpa [#allocation5], 1
    %s552 = scalar_lea.sflag [#allocation5], 1
    %553 = vsyncpa %s552, 1
    %554 = vsyncpa [#allocation6], 1
    %s555 = scalar_lea.sflag [#allocation6], 1
    %556 = vsyncpa %s555, 1
    %557 = vsyncpa [#allocation7], 1
    %s558 = scalar_lea.sflag [#allocation7], 1
    %559 = vsyncpa %s558, 1

</llo_original>
